<compile_context>
chip_gen: v7x
topology: tpu7x:2x2x1
jax: 0.10.0
libtpu: 0.0.40
codegen_flags: <defaults>
</compile_context>

<pallas_src>
import jax
import jax.numpy as jnp
from jax.experimental import pallas as pl
from jax.experimental.pallas import tpu as pltpu

K_SPRING = 64.0
OMEGA_F = 5.0
LANE = 128
SUBLANE = 8
TILE_ROWS = 2048           # (2, 2048, 128) f32 block = 2 MiB per slab
MIN_PALLAS_ELEMS = 32768   # below this, the XLA-fused JAX path is as fast


def _round_up(x, m):
    return -(-x // m) * m


def sdof_kernel(scalars_ref, state_ref, out_ref):
    # scalars_ref: SMEM f32[3] = [t, u0, v0]
    # state_ref / out_ref: VMEM f32[2, block_rows, 128]; index 0 = X, 1 = V.
    t = scalars_ref[0]
    u0 = scalars_ref[1]
    v0 = scalars_ref[2]

    # Scalar forcing term: sin/cos go to the EUP slot (free here), computed
    # once per grid step and broadcast over the tile.
    forcing = u0 * u0 * jnp.cos(OMEGA_F * t) + v0 * v0 * v0 * jnp.sin(OMEGA_F * t)

    x = state_ref[0]                        # full-tile load (block_rows, 128)
    v = state_ref[1]                        # full-tile load
    out_ref[0] = v                          # dX/dt = V        (unmasked store)
    out_ref[1] = -K_SPRING * x + forcing    # dV/dt = -k X + f (unmasked store)


def _pack_scalars(t, u, v):
    return jnp.stack([
        jnp.asarray(t, jnp.float32).reshape(()),
        jnp.asarray(u[0], jnp.float32).reshape(()),
        jnp.asarray(v[0], jnp.float32).reshape(()),
    ])


def sdof_rhs_slab(t, state_slab, u, v, *, tile_rows=TILE_ROWS):
    """RHS on a pre-padded lane-dense slab.

    state_slab: f32[2, rows, 128] with rows a multiple of 8.  Integrators with
    fixed N should keep state in this layout across calls (convert once at
    solver entry/exit) so the pad/reshape/slice passes are amortized away.
    """
    _, rows, _ = state_slab.shape

    # Aim for >= 2 grid steps on big problems so v7x's two TensorCores both
    # get work; cap so in+out double-buffered blocks stay at 8 MiB total.
    block_rows = min(tile_rows, max(SUBLANE, _round_up(pl.cdiv(rows, 2), SUBLANE)))
    grid = (pl.cdiv(rows, block_rows),)   # ragged last block handled by Pallas

    blk = pl.BlockSpec((2, block_rows, LANE), lambda i: (0, i, 0))
    smem_spec = pl.BlockSpec(memory_space=pltpu.MemorySpace.SMEM)  # scalars, untiled

    n_elems = 2 * rows * LANE
    return pl.pallas_call(
        sdof_kernel,
        out_shape=jax.ShapeDtypeStruct((2, rows, LANE), jnp.float32),
        grid=grid,
        in_specs=[smem_spec, blk],
        out_specs=blk,
        compiler_params=pltpu.CompilerParams(
            dimension_semantics=("parallel",)),
        cost_estimate=pl.CostEstimate(
            flops=2 * n_elems, transcendentals=2, bytes_accessed=8 * n_elems),
    )(_pack_scalars(t, u, v), state_slab)


def sdof_forward_ref(t, state, u, v):
    """Pure-JAX reference (also the small-N fast path)."""
    state = jnp.asarray(state, jnp.float32)
    X, V = state[0], state[1]
    forcing = u[0] ** 2 * jnp.cos(OMEGA_F * t) + v[0] ** 3 * jnp.sin(OMEGA_F * t)
    ddX = -K_SPRING * X + forcing
    return jnp.stack([V, ddX])


def sdof_forward(t, state, u, v, *, tile_rows=TILE_ROWS,
                 min_pallas_elems=MIN_PALLAS_ELEMS, force_pallas=False):
    """Pallas equivalent of SDOF.forward(t, state).  state: f32[2, N]."""
    state = jnp.asarray(state, jnp.float32)
    assert state.ndim == 2 and state.shape[0] == 2, "state must be (2, N)"
    n = state.shape[1]

    # Launch overhead dominates a 2-vreg VPU kernel; let XLA fuse small sizes.
    if n < min_pallas_elems and not force_pallas:
        return sdof_forward_ref(t, state, u, v)

    # Single pad+reshape into the fused (2, rows, 128) slab; rows padded only
    # to a multiple of 8 sublanes (a few KiB of slack at most).
    rows = _round_up(pl.cdiv(n, LANE), SUBLANE)
    n_pad = rows * LANE
    slab = state
    if n_pad != n:
        slab = jnp.pad(slab, ((0, 0), (0, n_pad - n)))
    slab = slab.reshape(2, rows, LANE)

    out = sdof_rhs_slab(t, slab, u, v, tile_rows=tile_rows)
    return out.reshape(2, n_pad)[:, :n]


if __name__ == "__main__":
    key = jax.random.PRNGKey(0)
    k_u, k_v, k_s1, k_s2 = jax.random.split(key, 4)

    u = jax.random.normal(k_u, (4,), dtype=jnp.float32)   # module's self.u; only u[0] used
    v = jax.random.normal(k_v, (4,), dtype=jnp.float32)   # module's self.v; only v[0] used
    t = jnp.float32(0.37)

    # 1) Small, non-multiple-of-128 N forced through the kernel (pad / slice path).
    n_small = 300
    state_small = jax.random.normal(k_s1, (2, n_small), dtype=jnp.float32)
    out_small = jax.block_until_ready(
        sdof_forward(t, state_small, u, v, force_pallas=True))
    ref_small = sdof_forward_ref(t, state_small, u, v)
    assert out_small.shape == state_small.shape and out_small.dtype == jnp.float32
    assert jnp.allclose(out_small, ref_small, atol=1e-5, rtol=1e-5)

    # 2) Larger N above the gate: multi-step 'parallel' grid with a ragged last block.
    n_big = 50_000
    state_big = jax.random.normal(k_s2, (2, n_big), dtype=jnp.float32)
    out_big = jax.block_until_ready(sdof_forward(t, state_big, u, v))
    ref_big = sdof_forward_ref(t, state_big, u, v)
    assert out_big.shape == state_big.shape and out_big.dtype == jnp.float32
    assert jnp.allclose(out_big, ref_big, atol=1e-5, rtol=1e-5)

    # 3) Small-N gate falls back to the fused pure-JAX path (no kernel launch).
    out_gate = jax.block_until_ready(sdof_forward(t, state_small, u, v))
    assert jnp.allclose(out_gate, ref_small, atol=1e-5, rtol=1e-5)

    print("KERNEL_OK")
</pallas_src>

<mosaic_0001>
module attributes {stable_mosaic.version = 11 : i64} {
  func.func @sdof_kernel(%arg0: i32, %arg1: memref<3xf32, #tpu.memory_space<smem>>, %arg2: memref<2x8x128xf32, #tpu.memory_space<vmem>>, %arg3: memref<2x8x128xf32, #tpu.memory_space<vmem>>) attributes {dimension_semantics = [#tpu.dimension_semantics<parallel>], iteration_bounds = array<i64: 1>, scalar_prefetch = 0 : i64, scratch_operands = 0 : i64, tpu.core_type = #tpu.core_type<tc>, window_params = [{transform_indices = @transform_0, window_bounds = array<i64: 3>}, {transform_indices = @transform_1, window_bounds = array<i64: 2, 8, 128>}, {transform_indices = @transform_2, window_bounds = array<i64: 2, 8, 128>}]} {
    %c0 = arith.constant 0 : index
    %0 = memref.load %arg1[%c0] : memref<3xf32, #tpu.memory_space<smem>>
    %c1 = arith.constant 1 : index
    %1 = memref.load %arg1[%c1] : memref<3xf32, #tpu.memory_space<smem>>
    %c2 = arith.constant 2 : index
    %2 = memref.load %arg1[%c2] : memref<3xf32, #tpu.memory_space<smem>>
    %3 = arith.mulf %1, %1 : f32
    %cst = arith.constant 5.000000e+00 : f32
    %4 = arith.mulf %cst, %0 : f32
    %5 = math.cos %4 : f32
    %6 = arith.mulf %3, %5 : f32
    %7 = arith.mulf %2, %2 : f32
    %8 = arith.mulf %7, %2 : f32
    %cst_0 = arith.constant 5.000000e+00 : f32
    %9 = arith.mulf %cst_0, %0 : f32
    %10 = math.sin %9 : f32
    %11 = arith.mulf %8, %10 : f32
    %12 = arith.addf %6, %11 : f32
    %c0_1 = arith.constant 0 : index
    %c0_2 = arith.constant 0 : index
    %c0_3 = arith.constant 0 : index
    %13 = vector.load %arg2[%c0_1, %c0_2, %c0_3] : memref<2x8x128xf32, #tpu.memory_space<vmem>>, vector<1x8x128xf32>
    %14 = vector.shape_cast %13 : vector<1x8x128xf32> to vector<8x128xf32>
    %c1_4 = arith.constant 1 : index
    %c0_5 = arith.constant 0 : index
    %c0_6 = arith.constant 0 : index
    %15 = vector.load %arg2[%c1_4, %c0_5, %c0_6] : memref<2x8x128xf32, #tpu.memory_space<vmem>>, vector<1x8x128xf32>
    %16 = vector.shape_cast %15 : vector<1x8x128xf32> to vector<8x128xf32>
    %c0_7 = arith.constant 0 : index
    %c0_8 = arith.constant 0 : index
    %c0_9 = arith.constant 0 : index
    %17 = vector.load %arg3[%c0_7, %c0_8, %c0_9] : memref<2x8x128xf32, #tpu.memory_space<vmem>>, vector<1x8x128xf32>
    %18 = vector.shape_cast %17 : vector<1x8x128xf32> to vector<8x128xf32>
    %19 = vector.shape_cast %16 : vector<8x128xf32> to vector<1x8x128xf32>
    tpu.vector_store %arg3[%c0_7, %c0_8, %c0_9], %19 {strides = array<i32>} : memref<2x8x128xf32, #tpu.memory_space<vmem>>, vector<1x8x128xf32>,
    %cst_10 = arith.constant -6.400000e+01 : f32
    %20 = vector.broadcast %cst_10 : f32 to vector<8x128xf32>
    %21 = arith.mulf %20, %14 : vector<8x128xf32>
    %22 = vector.broadcast %12 : f32 to vector<8x128xf32>
    %23 = arith.addf %21, %22 : vector<8x128xf32>
    %c1_11 = arith.constant 1 : index
    %c0_12 = arith.constant 0 : index
    %c0_13 = arith.constant 0 : index
    %24 = vector.load %arg3[%c1_11, %c0_12, %c0_13] : memref<2x8x128xf32, #tpu.memory_space<vmem>>, vector<1x8x128xf32>
    %25 = vector.shape_cast %24 : vector<1x8x128xf32> to vector<8x128xf32>
    %26 = vector.shape_cast %23 : vector<8x128xf32> to vector<1x8x128xf32>
    tpu.vector_store %arg3[%c1_11, %c0_12, %c0_13], %26 {strides = array<i32>} : memref<2x8x128xf32, #tpu.memory_space<vmem>>, vector<1x8x128xf32>,
    return
  }
  func.func @transform_0(%arg0: i32) -> i32 {
    %c0_i32 = arith.constant 0 : i32
    %c0_i32_0 = arith.constant 0 : i32
    return %c0_i32 : i32
  }
  func.func @transform_1(%arg0: i32) -> (i32, i32, i32) {
    %c0_i32 = arith.constant 0 : i32
    %c0_i32_0 = arith.constant 0 : i32
    %c0_i32_1 = arith.constant 0 : i32
    return %c0_i32, %arg0, %c0_i32_0 : i32, i32, i32
  }
  func.func @transform_2(%arg0: i32) -> (i32, i32, i32) {
    %c0_i32 = arith.constant 0 : i32
    %c0_i32_0 = arith.constant 0 : i32
    %c0_i32_1 = arith.constant 0 : i32
    return %c0_i32, %arg0, %c0_i32_0 : i32, i32, i32
  }
}

</mosaic_0001>

<llo_original>
// kernel: tpu_custom_call.1
$region0: #{tpu_custom_call.1}
  #allocation0 [shape = 'u32[]', space=smem, size = 0x4, offset = 0x4, fixed_abs, tag = 'smem constant byte address 0x4 - core index']
  #allocation1 [shape = 'u32[144,128]{1,0:T(1,128)}', space=vmem, size = 0x12000, scoped, tag = 'internal scratch']
  %s0 = inlined_call_operand.hbm [shape: f32[3], index: 0, kind: input, shape index: {}]
  %s1 = inlined_call_operand.hbm [shape: f32[2,8,128], index: 1, kind: input, shape index: {}]
  %s2 = inlined_call_operand.hbm [shape: f32[2,8,128], index: 2, kind: output, shape index: {}]
  %s3 = sld [smem:[#allocation0]]
  $region26: #{tpu_custom_call.1} parent=0
    _
  %s5 = ssub.s32 1, %s3
  %s6 = scalar_select 0, %s5, %s3
  $region1: #{tpu_custom_call.1} parent=0
    #allocation2 [shape = 'u8[512]{0}', space=smem, size = 0x200, scoped, tag = 'input window, operand 0, single buffered']
    #allocation3 [shape = 's32[1]{0}', space=sflag, size = 0x4, scoped, tag = 'scoped memory for tpu_custom_call.1']
    #allocation4 [shape = 's32[1]{0}', space=sflag, size = 0x4, scoped, tag = 'scoped memory for tpu_custom_call.1']
    #allocation5 [shape = 's32[1]{0}', space=sflag, size = 0x4, scoped, tag = 'scoped memory for tpu_custom_call.1']
    #allocation6 [shape = 'u8[8192]{0}', space=vmem, size = 0x2000, scoped, tag = 'input window, operand 1, single buffered']
    #allocation7 [shape = 'u8[8192]{0}', space=vmem, size = 0x2000, scoped, tag = 'output window, operand 0, single buffered']
    %7 = vsyncpa [#allocation5], 0
    %8 = vsyncpa [#allocation3], 0
    %9 = vsyncpa [#allocation4], 0
    // Predicated region
    $region2: #{tpu_custom_call.1} parent=1 // pred_check
      _
    $region3: #{tpu_custom_call.1} parent=1 // pred_check_branch
      %11 = sbr.rel (0) target = $region5
    $region4: #{tpu_custom_call.1} parent=1 // pred_region
      %s13 = ssub.s32 16, 16
      %14 = vsyncadd [#allocation5], %s13
      %17 = dma.hbm_to_smem %s0, 16, [#allocation2], [#allocation5]
    $region5: #{tpu_custom_call.1} parent=1 // pred_fallthru
      _
    // Predicated region
    $region6: #{tpu_custom_call.1} parent=1 // pred_check
      _
    $region7: #{tpu_custom_call.1} parent=1 // pred_check_branch
      %19 = sbr.rel (0) target = $region9
    $region8: #{tpu_custom_call.1} parent=1 // pred_region
      %s21 = ssub.s32 256, 256
      %22 = vsyncadd [#allocation3], %s21
      %s23 = sshll.u32 [#allocation6], 4
      %s24 = int_to_ptr.vmem [resolvable:$true] %s23
      %29 = dma.hbm_to_vmem [thread:$0]  %s1, 256, %s24, [#allocation3], 128, 128, 8
    $region9: #{tpu_custom_call.1} parent=1 // pred_fallthru
      _
    // Predicated region
    $region10: #{tpu_custom_call.1} parent=1 // pred_check
      _
    $region11: #{tpu_custom_call.1} parent=1 // pred_check_branch
      %31 = sbr.rel (0) target = $region13
    $region12: #{tpu_custom_call.1} parent=1 // pred_region
      %32 = dma.done [#allocation5], 16
    $region13: #{tpu_custom_call.1} parent=1 // pred_fallthru
      _
    // Predicated region
    $region14: #{tpu_custom_call.1} parent=1 // pred_check
      _
    $region15: #{tpu_custom_call.1} parent=1 // pred_check_branch
      %34 = sbr.rel (0) target = $region17
    $region16: #{tpu_custom_call.1} parent=1 // pred_region
      %35 = dma.done [#allocation3], 256
    $region17: #{tpu_custom_call.1} parent=1 // pred_fallthru
      _
    %36 = sfence
    %s37 = sld [smem:[#allocation2]]
    %s38 = sld [smem:[#allocation2 + $0x1]]
    %s39 = sld [smem:[#allocation2 + $0x2]]
    %s40 = smul.f32 %s38, %s38
    %s41 = smul.f32 %s37, 5.0
    %v42 = vstv %s41
    %v43 = vand.u32 2147483647, %v42
    %vm44 = vcmp.le.f32.partialorder %v43, 0.7853982
    %vm45 = vcmp.lt.s32.totalorder %v42, 0
    %v46 = vand.u32 %v42, 2139095040
    %v47 = vshrl.u32 %v46, 23
    %v48 = vsub.s32 %v47, 127
    %v49 = vand.u32 2147483647, %v42
    %v50 = vand.u32 %v49, 8388607
    %v51 = vor.u32 %v50, 8388608
    %v52 = vsub.s32 0, %v51
    %v53 = vadd.s32 %v48, 1
    %vm54 = vcmp.gt.s32.totalorder %v53, 0
    %v55 = vsel %vm54, %v53, 0
    %v56 = vshrl.u32 %v55, 5
    %v57 = vand.u32 %v55, 31
    %v58 = vsub.s32 32, %v57
    %v59 = vshrl.u32 683565275, %v58
    %v60 = vshll.u32 683565275, %v57
    %v61 = vshrl.u32 2475754826, %v58
    %v62 = vor.u32 %v60, %v61
    %v63 = vshll.u32 2475754826, %v57
    %v64 = vshrl.u32 2131351028, %v58
    %v65 = vor.u32 %v63, %v64
    %v66 = vshll.u32 2131351028, %v57
    %v67 = vshrl.u32 2102212464, %v58
    %v68 = vor.u32 %v66, %v67
    %v69 = vshll.u32 2102212464, %v57
    %v70 = vshrl.u32 920167782, %v58
    %v71 = vor.u32 %v69, %v70
    %v72 = vshll.u32 920167782, %v57
    %v73 = vshrl.u32 1326507024, %v58
    %v74 = vor.u32 %v72, %v73
    %vm75 = vcmp.lt.s32.totalorder %v56, 1
    %vm76 = vcmp.lt.s32.totalorder %v56, 2
    %vm77 = vcmp.lt.s32.totalorder %v56, 3
    %vm78 = vcmp.lt.s32.totalorder %v56, 4
    %v79 = vsel %vm75, %v59, %v62
    %v80 = vsel %vm78, %v68, 2102212464
    %v81 = vsel %vm77, %v65, %v80
    %v82 = vsel %vm76, %v79, %v81
    %v83 = vsel %vm75, %v62, %v65
    %v84 = vsel %vm78, %v71, 920167782
    %v85 = vsel %vm77, %v68, %v84
    %v86 = vsel %vm76, %v83, %v85
    %v87 = vsel %vm75, %v65, %v68
    %v88 = vsel %vm78, %v74, 1326507024
    %v89 = vsel %vm77, %v71, %v88
    %v90 = vsel %vm76, %v87, %v89
    %v91 = vshll.u32 %v51, 8
    %v92 = vmul.u32.u64.compose %v91, %v90
    %v93 = vextract.low.u32 %v92
    %v94 = vextract.high.u32 %v92
    %v95 = vmul.u32.u64.compose %v91, %v86
    %v96 = vextract.low.u32 %v95
    %v97 = vextract.high.u32 %v95
    %v98 = vmul.u32 %v91, %v82
    %v99 = vadd.s32 %v94, %v96
    %vm100 = vc.u32 %v94, %v96
    %v101 = vadd.s32 %v97, 1
    %v102 = vsel %vm100, %v101, %v97
    %v103 = vadd.s32 %v98, %v102
    %v104 = vadd.s32 %v103, 536870912
    %v105 = vshrl.u32 %v104, 30
    %v106 = vshll.u32 %v105, 30
    %v107 = vsub.s32 %v103, %v106
    %vm108 = vcmp.lt.s32.totalorder %v107, 0
    %v109 = vsub.s32 0, %v107
    %v110 = vsel %vm108, %v109, %v107
    %v111 = vclz %v110
    %v112 = vsub.s32 %v111, 2
    %vm113 = vcmp.gt.s32.totalorder 0, %v112
    %v114 = vsel %vm113, 0, %v112
    %v115 = vsub.s32 32, %v114
    %v116 = vshll.u32 %v107, %v114
    %v117 = vshrl.u32 %v99, %v115
    %v118 = vor.u32 %v116, %v117
    %v119 = vsub.s32 4294967266, %v114
    %v120 = vadd.s32 %v119, 127
    %v121 = vshll.u32 %v120, 23
    %v122 = vor.u32 4788187, %v121
    %v123 = vand.u32 2147483647, %v122
    %v125 = vcvt.s32.f32 %v118
    %v126 = vmul.f32 %v125, %v123
    %v127 = vxor.u32 %v126, 2147483648
    %v128 = vsel %vm45, %v127, %v126
    %v129 = vsub.s32 4, %v105
    %v130 = vsel %vm45, %v129, %v105
    %v131 = vsel %vm44, %v42, %v128
    %v132 = vsel %vm44, 0, %v130
    %v133 = vcosq.f32.pop %v131
    %v134 = vsinq.f32.pop %v131
    %vm135 = vweird.f32 %v42
    %v136 = vand.u32 %v132, 3
    %vm137 = vcmp.lt.s32.totalorder %v136, 2
    %vm138 = vcmp.eq.s32.totalorder %v136, 0
    %v139 = vxor.u32 %v134, 2147483648
    %v140 = vsel %vm138, %v133, %v139
    %vm141 = vcmp.eq.s32.totalorder %v136, 2
    %v142 = vxor.u32 %v133, 2147483648
    %v143 = vsel %vm141, %v142, %v134
    %v144 = vsel %vm137, %v140, %v143
    %v145 = vsel %vm135, nan, %v144
    %s146 = vtos %v145
    %s147 = smul.f32 %s40, %s146
    %s148 = smul.f32 %s39, %s39
    %s149 = smul.f32 %s148, %s39
    %v150 = vstv %s41
    %v151 = vand.u32 2147483647, %v150
    %vm152 = vcmp.le.f32.partialorder %v151, 0.7853982
    %vm153 = vcmp.lt.s32.totalorder %v150, 0
    %v154 = vand.u32 %v150, 2139095040
    %v155 = vshrl.u32 %v154, 23
    %v156 = vsub.s32 %v155, 127
    %v157 = vand.u32 2147483647, %v150
    %v158 = vand.u32 %v157, 8388607
    %v159 = vor.u32 %v158, 8388608
    %v160 = vsub.s32 0, %v159
    %v161 = vadd.s32 %v156, 1
    %vm162 = vcmp.gt.s32.totalorder %v161, 0
    %v163 = vsel %vm162, %v161, 0
    %v164 = vshrl.u32 %v163, 5
    %v165 = vand.u32 %v163, 31
    %v166 = vsub.s32 32, %v165
    %v167 = vshrl.u32 683565275, %v166
    %v168 = vshll.u32 683565275, %v165
    %v169 = vshrl.u32 2475754826, %v166
    %v170 = vor.u32 %v168, %v169
    %v171 = vshll.u32 2475754826, %v165
    %v172 = vshrl.u32 2131351028, %v166
    %v173 = vor.u32 %v171, %v172
    %v174 = vshll.u32 2131351028, %v165
    %v175 = vshrl.u32 2102212464, %v166
    %v176 = vor.u32 %v174, %v175
    %v177 = vshll.u32 2102212464, %v165
    %v178 = vshrl.u32 920167782, %v166
    %v179 = vor.u32 %v177, %v178
    %v180 = vshll.u32 920167782, %v165
    %v181 = vshrl.u32 1326507024, %v166
    %v182 = vor.u32 %v180, %v181
    %vm183 = vcmp.lt.s32.totalorder %v164, 1
    %vm184 = vcmp.lt.s32.totalorder %v164, 2
    %vm185 = vcmp.lt.s32.totalorder %v164, 3
    %vm186 = vcmp.lt.s32.totalorder %v164, 4
    %v187 = vsel %vm183, %v167, %v170
    %v188 = vsel %vm186, %v176, 2102212464
    %v189 = vsel %vm185, %v173, %v188
    %v190 = vsel %vm184, %v187, %v189
    %v191 = vsel %vm183, %v170, %v173
    %v192 = vsel %vm186, %v179, 920167782
    %v193 = vsel %vm185, %v176, %v192
    %v194 = vsel %vm184, %v191, %v193
    %v195 = vsel %vm183, %v173, %v176
    %v196 = vsel %vm186, %v182, 1326507024
    %v197 = vsel %vm185, %v179, %v196
    %v198 = vsel %vm184, %v195, %v197
    %v199 = vshll.u32 %v159, 8
    %v200 = vmul.u32.u64.compose %v199, %v198
    %v201 = vextract.low.u32 %v200
    %v202 = vextract.high.u32 %v200
    %v203 = vmul.u32.u64.compose %v199, %v194
    %v204 = vextract.low.u32 %v203
    %v205 = vextract.high.u32 %v203
    %v206 = vmul.u32 %v199, %v190
    %v207 = vadd.s32 %v202, %v204
    %vm208 = vc.u32 %v202, %v204
    %v209 = vadd.s32 %v205, 1
    %v210 = vsel %vm208, %v209, %v205
    %v211 = vadd.s32 %v206, %v210
    %v212 = vadd.s32 %v211, 536870912
    %v213 = vshrl.u32 %v212, 30
    %v214 = vshll.u32 %v213, 30
    %v215 = vsub.s32 %v211, %v214
    %vm216 = vcmp.lt.s32.totalorder %v215, 0
    %v217 = vsub.s32 0, %v215
    %v218 = vsel %vm216, %v217, %v215
    %v219 = vclz %v218
    %v220 = vsub.s32 %v219, 2
    %vm221 = vcmp.gt.s32.totalorder 0, %v220
    %v222 = vsel %vm221, 0, %v220
    %v223 = vsub.s32 32, %v222
    %v224 = vshll.u32 %v215, %v222
    %v225 = vshrl.u32 %v207, %v223
    %v226 = vor.u32 %v224, %v225
    %v227 = vsub.s32 4294967266, %v222
    %v228 = vadd.s32 %v227, 127
    %v229 = vshll.u32 %v228, 23
    %v230 = vor.u32 4788187, %v229
    %v231 = vand.u32 2147483647, %v230
    %v233 = vcvt.s32.f32 %v226
    %v234 = vmul.f32 %v233, %v231
    %v235 = vxor.u32 %v234, 2147483648
    %v236 = vsel %vm153, %v235, %v234
    %v237 = vsub.s32 4, %v213
    %v238 = vsel %vm153, %v237, %v213
    %v239 = vsel %vm152, %v150, %v236
    %v240 = vsel %vm152, 0, %v238
    %v241 = vcosq.f32.pop %v239
    %v242 = vsinq.f32.pop %v239
    %vm243 = vweird.f32 %v150
    %v244 = vadd.s32 %v240, 3
    %v245 = vand.u32 %v244, 3
    %vm246 = vcmp.lt.s32.totalorder %v245, 2
    %vm247 = vcmp.eq.s32.totalorder %v245, 0
    %v248 = vxor.u32 %v242, 2147483648
    %v249 = vsel %vm247, %v241, %v248
    %vm250 = vcmp.eq.s32.totalorder %v245, 2
    %v251 = vxor.u32 %v241, 2147483648
    %v252 = vsel %vm250, %v251, %v242
    %v253 = vsel %vm246, %v249, %v252
    %v254 = vsel %vm243, nan, %v253
    %s255 = vtos %v254
    %s256 = smul.f32 %s149, %s255
    %s257 = sadd.f32 %s147, %s256
    %v258 = vld [vmem:[#allocation6] sm:$0xff]
    %s259 = scalar_lea.vmem [#allocation6], 8
    %v260 = vld [vmem:[%s259] sm:$0xff]
    %261 = vst [vmem:[#allocation7] sm:$0xff] %v260
    %v262 = vmul.f32 %v258, -64.0
    %v263 = vstv %s257
    %v264 = vadd.f32 %v262, %v263
    %s265 = scalar_lea.vmem [#allocation7], 8
    %266 = vst [vmem:[%s265] sm:$0xff] %v264
    // Predicated region
    $region18: #{tpu_custom_call.1} parent=1 // pred_check
      _
    $region19: #{tpu_custom_call.1} parent=1 // pred_check_branch
      %268 = sbr.rel (0) target = $region21
    $region20: #{tpu_custom_call.1} parent=1 // pred_region
      %s270 = ssub.s32 256, 256
      %271 = vsyncadd [#allocation4], %s270
      %s272 = sshll.u32 [#allocation7], 4
      %s273 = int_to_ptr.vmem [resolvable:$true] %s272
      %278 = dma.vmem_to_hbm [thread:$0]  %s273, 256, %s2, [#allocation4], 128, 128, 8
    $region21: #{tpu_custom_call.1} parent=1 // pred_fallthru
      _
    // Predicated region
    $region22: #{tpu_custom_call.1} parent=1 // pred_check
      _
    $region23: #{tpu_custom_call.1} parent=1 // pred_check_branch
      %280 = sbr.rel (0) target = $region25
    $region24: #{tpu_custom_call.1} parent=1 // pred_region
      %281 = dma.done [#allocation4], 256
    $region25: #{tpu_custom_call.1} parent=1 // pred_fallthru
      _
    %282 = vsyncpa [#allocation3], 1
    %283 = vsyncpa [#allocation4], 1
    %284 = vsyncpa [#allocation5], 1

</llo_original>
